<compile_context>
chip_gen: v6e
topology: v6e:2x2x1
jax: 0.10.0
libtpu: 0.0.40
codegen_flags: <defaults>
</compile_context>

<pallas_src>
import functools

import numpy as np
import jax
import jax.numpy as jnp
from jax import lax
from jax.experimental import pallas as pl
from jax.experimental.pallas import tpu as pltpu

_LANES = 128
_SUBLANES = 8


def build_position_encoding_table(d_model: int, max_seq_len: int) -> jnp.ndarray:
    """Deterministic parameter init: matches the PyTorch __init__ exactly."""
    pos = np.arange(max_seq_len, dtype=np.float64)[:, None]
    j = np.arange(d_model, dtype=np.float64)[None, :]
    pe = pos / np.power(10000.0, 2.0 * (j // 2) / d_model)
    pe[:, 0::2] = np.sin(pe[:, 0::2])
    pe[:, 1::2] = np.cos(pe[:, 1::2])
    pe = pe.astype(np.float32)                              # .float() in torch
    pad_row = np.zeros((1, d_model), dtype=np.float32)
    return jnp.asarray(np.concatenate([pad_row, pe], axis=0))  # [max_seq_len+1, D]


def _pe_kernel(lens_ref, table_ref, out_ref, *, block_b: int, f_tile: int,
               d_model: int):
    # lens_ref  : SMEM int32 [b_pad]                (scalar-prefetched)
    # table_ref : VMEM f32  [f_tile, 128]           (one F tile of the flat table)
    # out_ref   : VMEM f32  [block_b, f_tile, 128]
    j = pl.program_id(0)   # F-tile index   (outer grid axis: table tile reused)
    i = pl.program_id(1)   # batch-block index (inner grid axis)

    # Flat element index within one [T, D] slab.  Position t = flat // D, so
    # (t < len) <=> (flat < len * D): one compare, no division.
    base = j * (f_tile * _LANES)
    flat = (base
            + lax.broadcasted_iota(jnp.int32, (f_tile, _LANES), 0) * _LANES
            + lax.broadcasted_iota(jnp.int32, (f_tile, _LANES), 1))
    tab = table_ref[...]                      # load the table tile exactly once

    def write_row(b, carry):
        thresh = lens_ref[i * block_b + b] * d_model
        out_ref[b] = jnp.where(flat < thresh, tab, 0.0)
        return carry

    if block_b == 1:
        write_row(0, None)
    else:
        # Bounded-unroll loop: keeps code size / vreg live ranges sane when
        # block_b is large (kernel is DMA-bound, loop overhead is irrelevant).
        lax.fori_loop(0, block_b, write_row, None, unroll=min(8, block_b))


def _chip_config():
    """(target out-block bytes, tensorcores per chip) for the local TPU gen."""
    try:
        kind = jax.devices()[0].device_kind.lower()
    except Exception:
        kind = ""
    if "v5 lite" in kind or "v5e" in kind or "v5lite" in kind:
        return 4 << 20, 1          # v5e: small scoped-VMEM default
    if "v7" in kind or "7x" in kind or "tpu7" in kind:
        return 6 << 20, 2          # v7x: 2 TCs, 64 MiB VMEM/TC, 3.2 TB/s HBM
    return 8 << 20, 1              # v6e-like default


def _pick_block_b(batch: int, cap: int) -> int:
    """Prefer a batch-block size that divides batch (no padded writeback)."""
    cap = max(1, min(cap, batch))
    div = max(d for d in range(1, cap + 1) if batch % d == 0)
    if div >= (cap + 1) // 2:
        return div                     # within 2x of the target, zero waste
    waste = (-batch) % cap
    if waste * 8 <= batch:             # padding waste <= 12.5% of the writes
        return cap
    return div


def positional_encoding_forward(input_len, table, *, max_len=None, block_b=None,
                                target_block_bytes=None, f_tile_cap=1024):
    """input_len: int array [B, 1] or [B]; table: [max_seq_len + 1, d_model].

    Pass a static `max_len` (>= max(input_len)) to skip the torch.max() host
    sync and make the whole wrapper jit-compatible.
    """
    lens = jnp.asarray(input_len, jnp.int32).reshape(-1)
    batch = int(lens.shape[0])
    max_seq_len = int(table.shape[0]) - 1
    d_model = int(table.shape[1])

    # PyTorch's embedding lookup would raise on an out-of-range index; clamp
    # instead (documented semantic deviation).
    lens = jnp.clip(lens, 0, max_seq_len)

    if max_len is None:
        # torch.max(input_len): data-dependent output length -> one host sync,
        # exactly like the eager PyTorch module resolves it.
        max_len = int(jnp.max(lens)) if batch > 0 else 0
    max_len = int(max_len)

    if batch == 0 or max_len == 0:
        return jnp.zeros((batch, max_len, d_model), jnp.float32)

    target_bytes, cores = _chip_config()
    if target_block_bytes is not None:
        target_bytes = int(target_block_bytes)

    # ---- lane-dense flat geometry: one batch row = f_row x 128 elements ----
    need_elems = max_len * d_model                    # real elements per row
    f_row = -(-need_elems // _LANES)
    f_row = -(-f_row // _SUBLANES) * _SUBLANES        # sublane multiple
    f_tile_cap = max(_SUBLANES, (int(f_tile_cap) // _SUBLANES) * _SUBLANES)
    if f_row <= f_tile_cap:
        f_tile, n_f = f_row, 1
    else:
        f_tile = f_tile_cap
        n_f = -(-f_row // f_tile)
    f_total = n_f * f_tile

    # ---- batch blocking -----------------------------------------------------
    row_tile_bytes = f_tile * _LANES * 4
    if block_b is None:
        cap = max(1, target_bytes // row_tile_bytes)
        if cores >= 2 and n_f == 1 and batch >= 2:
            cap = min(cap, -(-batch // 2))   # keep >=2 parallel steps (dual TC)
        block_b = _pick_block_b(batch, cap)
    block_b = max(1, min(int(block_b), batch))
    n_b = -(-batch // block_b)
    b_pad = n_b * block_b
    lens_p = lens if b_pad == batch else jnp.concatenate(
        [lens, jnp.zeros((b_pad - batch,), jnp.int32)])

    # ---- flat table for positions 1.. (zero-padded; padded area always masked)
    n_elems = f_total * _LANES
    n_pos = -(-n_elems // d_model)
    rows = min(n_pos, max_seq_len)
    tab_flat = table[1:1 + rows].astype(jnp.float32).reshape(-1)
    have = int(tab_flat.shape[0])
    if have < n_elems:
        tab_flat = jnp.concatenate(
            [tab_flat, jnp.zeros((n_elems - have,), jnp.float32)])
    elif have > n_elems:
        tab_flat = tab_flat[:n_elems]
    tab_flat = tab_flat.reshape(f_total, _LANES)

    # ---- VMEM budget: 2x out block (double buffer) + 2x table tile + temps --
    out_block_bytes = block_b * row_tile_bytes
    vmem_limit = 2 * out_block_bytes + 2 * row_tile_bytes + 4 * row_tile_bytes
    vmem_limit = int(min(max(vmem_limit + (4 << 20), 20 << 20), 56 << 20))

    kernel = functools.partial(_pe_kernel, block_b=block_b, f_tile=f_tile,
                               d_model=d_model)

    out_flat = pl.pallas_call(
        kernel,
        out_shape=jax.ShapeDtypeStruct((b_pad, f_total, _LANES), jnp.float32),
        grid_spec=pltpu.PrefetchScalarGridSpec(
            num_scalar_prefetch=1,
            grid=(n_f, n_b),                      # F outer, batch-block inner
            in_specs=[pl.BlockSpec((f_tile, _LANES),
                                   lambda j, i, lens_ref: (j, 0))],
            out_specs=pl.BlockSpec((block_b, f_tile, _LANES),
                                   lambda j, i, lens_ref: (i, j, 0)),
        ),
        compiler_params=pltpu.CompilerParams(
            dimension_semantics=("parallel", "parallel"),
            vmem_limit_bytes=vmem_limit),
        cost_estimate=pl.CostEstimate(
            flops=0, transcendentals=0,
            bytes_accessed=(b_pad * f_total * _LANES + f_total * _LANES) * 4
                           + b_pad * 4),
    )(lens_p, tab_flat)

    # ---- layout plumbing: slice only when padding exists (under jit the
    # slice fuses into the consumer) ------------------------------------------
    flat = out_flat.reshape(b_pad, f_total * _LANES)
    if b_pad == batch and f_total * _LANES == need_elems:
        return flat.reshape(batch, max_len, d_model)
    return flat[:batch, :need_elems].reshape(batch, max_len, d_model)


def _reference(input_len, table):
    """Pure-JAX reference reproducing the PyTorch forward."""
    lens = jnp.clip(jnp.asarray(input_len, jnp.int32).reshape(-1),
                    0, table.shape[0] - 1)
    max_len = int(jnp.max(lens))
    t = jnp.arange(max_len, dtype=jnp.int32)[None, :]            # [1, T]
    pos = jnp.where(t < lens[:, None], t + 1, 0)                 # [B, T]
    return table[pos]                                            # [B, T, D]


if __name__ == "__main__":
    key = jax.random.PRNGKey(0)
    k1, k2 = jax.random.split(key, 2)

    # --- Test 1: module-sized shapes, default (generation-aware) tiling -----
    d_model, max_seq_len, batch = 32, 16, 4
    table = build_position_encoding_table(d_model, max_seq_len)
    input_len = jax.random.randint(k1, (batch, 1), 1, max_seq_len + 1,
                                   dtype=jnp.int32)
    out = jax.block_until_ready(positional_encoding_forward(input_len, table))
    ref = _reference(input_len, table)
    assert out.shape == ref.shape, (out.shape, ref.shape)
    np.testing.assert_allclose(np.asarray(out), np.asarray(ref),
                               rtol=0.0, atol=0.0)

    # Static max_len: no host sync, jit-friendly path.
    out_s = jax.block_until_ready(
        positional_encoding_forward(input_len, table, max_len=int(ref.shape[1])))
    np.testing.assert_allclose(np.asarray(out_s), np.asarray(ref),
                               rtol=0.0, atol=0.0)

    # --- Test 2: exercises the F-tiling + fori_loop(batch-block) paths ------
    d_model2, max_seq_len2, batch2 = 40, 64, 6
    table2 = build_position_encoding_table(d_model2, max_seq_len2)
    input_len2 = jax.random.randint(k2, (batch2, 1), 33, max_seq_len2 + 1,
                                    dtype=jnp.int32)
    out2 = jax.block_until_ready(
        positional_encoding_forward(input_len2, table2,
                                    target_block_bytes=3 * 8 * _LANES * 4,
                                    f_tile_cap=8))
    ref2 = _reference(input_len2, table2)
    np.testing.assert_allclose(np.asarray(out2), np.asarray(ref2),
                               rtol=0.0, atol=0.0)

    # --- Test 3: explicit block_b that does not divide the batch (padded
    # batch rows + post-kernel trim fallback) ---------------------------------
    out3 = jax.block_until_ready(
        positional_encoding_forward(input_len2, table2, block_b=4))
    np.testing.assert_allclose(np.asarray(out3), np.asarray(ref2),
                               rtol=0.0, atol=0.0)

    print("KERNEL_OK")
</pallas_src>

<mosaic_0001>
module attributes {stable_mosaic.version = 11 : i64} {
  func.func @_pe_kernel(%arg0: i32, %arg1: i32, %arg2: memref<4xi32, #tpu.memory_space<smem>>, %arg3: memref<8x128xf32, #tpu.memory_space<vmem>>, %arg4: memref<4x8x128xf32, #tpu.memory_space<vmem>>) attributes {dimension_semantics = [#tpu.dimension_semantics<parallel>, #tpu.dimension_semantics<parallel>], iteration_bounds = array<i64: 1, 1>, scalar_prefetch = 1 : i64, scratch_operands = 0 : i64, tpu.core_type = #tpu.core_type<tc>, window_params = [{transform_indices = @transform_0, window_bounds = array<i64: 8, 128>}, {transform_indices = @transform_1, window_bounds = array<i64: 4, 8, 128>}]} {
    %c1024_i32 = arith.constant 1024 : i32
    %0 = arith.muli %arg0, %c1024_i32 : i32
    %1 = tpu.iota {dimensions = array<i32: 0>} : vector<8x128xi32>
    %c128_i32 = arith.constant 128 : i32
    %2 = vector.broadcast %c128_i32 : i32 to vector<8x128xi32>
    %3 = arith.muli %1, %2 : vector<8x128xi32>
    %4 = vector.broadcast %0 : i32 to vector<8x128xi32>
    %5 = arith.addi %4, %3 : vector<8x128xi32>
    %6 = tpu.iota {dimensions = array<i32: 1>} : vector<8x128xi32>
    %7 = arith.addi %5, %6 : vector<8x128xi32>
    %c0 = arith.constant 0 : index
    %c0_0 = arith.constant 0 : index
    %8 = vector.load %arg3[%c0, %c0_0] : memref<8x128xf32, #tpu.memory_space<vmem>>, vector<8x128xf32>
    %c0_i32 = arith.constant 0 : i32
    %c4_i32 = arith.constant 4 : i32
    %9 = arith.muli %arg1, %c4_i32 : i32
    %10 = arith.addi %9, %c0_i32 : i32
    %11 = arith.index_cast %10 : i32 to index
    %12 = memref.load %arg2[%11] : memref<4xi32, #tpu.memory_space<smem>>
    %c32_i32 = arith.constant 32 : i32
    %13 = arith.muli %12, %c32_i32 : i32
    %14 = vector.broadcast %13 : i32 to vector<8x128xi32>
    %15 = arith.cmpi slt, %7, %14 : vector<8x128xi32>
    %cst = arith.constant 0.000000e+00 : f32
    %16 = vector.broadcast %cst : f32 to vector<8x128xf32>
    %17 = arith.select %15, %8, %16 : vector<8x128xi1>, vector<8x128xf32>
    %18 = arith.index_cast %c0_i32 : i32 to index
    %c0_1 = arith.constant 0 : index
    %c0_2 = arith.constant 0 : index
    %19 = vector.load %arg4[%18, %c0_1, %c0_2] : memref<4x8x128xf32, #tpu.memory_space<vmem>>, vector<1x8x128xf32>
    %20 = vector.shape_cast %19 : vector<1x8x128xf32> to vector<8x128xf32>
    %21 = vector.shape_cast %17 : vector<8x128xf32> to vector<1x8x128xf32>
    tpu.vector_store %arg4[%18, %c0_1, %c0_2], %21 {strides = array<i32>} : memref<4x8x128xf32, #tpu.memory_space<vmem>>, vector<1x8x128xf32>,
    %c1_i32 = arith.constant 1 : i32
    %c4_i32_3 = arith.constant 4 : i32
    %22 = arith.muli %arg1, %c4_i32_3 : i32
    %23 = arith.addi %22, %c1_i32 : i32
    %24 = arith.index_cast %23 : i32 to index
    %25 = memref.load %arg2[%24] : memref<4xi32, #tpu.memory_space<smem>>
    %c32_i32_4 = arith.constant 32 : i32
    %26 = arith.muli %25, %c32_i32_4 : i32
    %27 = vector.broadcast %26 : i32 to vector<8x128xi32>
    %28 = arith.cmpi slt, %7, %27 : vector<8x128xi32>
    %cst_5 = arith.constant 0.000000e+00 : f32
    %29 = vector.broadcast %cst_5 : f32 to vector<8x128xf32>
    %30 = arith.select %28, %8, %29 : vector<8x128xi1>, vector<8x128xf32>
    %31 = arith.index_cast %c1_i32 : i32 to index
    %c0_6 = arith.constant 0 : index
    %c0_7 = arith.constant 0 : index
    %32 = vector.load %arg4[%31, %c0_6, %c0_7] : memref<4x8x128xf32, #tpu.memory_space<vmem>>, vector<1x8x128xf32>
    %33 = vector.shape_cast %32 : vector<1x8x128xf32> to vector<8x128xf32>
    %34 = vector.shape_cast %30 : vector<8x128xf32> to vector<1x8x128xf32>
    tpu.vector_store %arg4[%31, %c0_6, %c0_7], %34 {strides = array<i32>} : memref<4x8x128xf32, #tpu.memory_space<vmem>>, vector<1x8x128xf32>,
    %c2_i32 = arith.constant 2 : i32
    %c4_i32_8 = arith.constant 4 : i32
    %35 = arith.muli %arg1, %c4_i32_8 : i32
    %36 = arith.addi %35, %c2_i32 : i32
    %37 = arith.index_cast %36 : i32 to index
    %38 = memref.load %arg2[%37] : memref<4xi32, #tpu.memory_space<smem>>
    %c32_i32_9 = arith.constant 32 : i32
    %39 = arith.muli %38, %c32_i32_9 : i32
    %40 = vector.broadcast %39 : i32 to vector<8x128xi32>
    %41 = arith.cmpi slt, %7, %40 : vector<8x128xi32>
    %cst_10 = arith.constant 0.000000e+00 : f32
    %42 = vector.broadcast %cst_10 : f32 to vector<8x128xf32>
    %43 = arith.select %41, %8, %42 : vector<8x128xi1>, vector<8x128xf32>
    %44 = arith.index_cast %c2_i32 : i32 to index
    %c0_11 = arith.constant 0 : index
    %c0_12 = arith.constant 0 : index
    %45 = vector.load %arg4[%44, %c0_11, %c0_12] : memref<4x8x128xf32, #tpu.memory_space<vmem>>, vector<1x8x128xf32>
    %46 = vector.shape_cast %45 : vector<1x8x128xf32> to vector<8x128xf32>
    %47 = vector.shape_cast %43 : vector<8x128xf32> to vector<1x8x128xf32>
    tpu.vector_store %arg4[%44, %c0_11, %c0_12], %47 {strides = array<i32>} : memref<4x8x128xf32, #tpu.memory_space<vmem>>, vector<1x8x128xf32>,
    %c3_i32 = arith.constant 3 : i32
    %c4_i32_13 = arith.constant 4 : i32
    %48 = arith.muli %arg1, %c4_i32_13 : i32
    %49 = arith.addi %48, %c3_i32 : i32
    %50 = arith.index_cast %49 : i32 to index
    %51 = memref.load %arg2[%50] : memref<4xi32, #tpu.memory_space<smem>>
    %c32_i32_14 = arith.constant 32 : i32
    %52 = arith.muli %51, %c32_i32_14 : i32
    %53 = vector.broadcast %52 : i32 to vector<8x128xi32>
    %54 = arith.cmpi slt, %7, %53 : vector<8x128xi32>
    %cst_15 = arith.constant 0.000000e+00 : f32
    %55 = vector.broadcast %cst_15 : f32 to vector<8x128xf32>
    %56 = arith.select %54, %8, %55 : vector<8x128xi1>, vector<8x128xf32>
    %57 = arith.index_cast %c3_i32 : i32 to index
    %c0_16 = arith.constant 0 : index
    %c0_17 = arith.constant 0 : index
    %58 = vector.load %arg4[%57, %c0_16, %c0_17] : memref<4x8x128xf32, #tpu.memory_space<vmem>>, vector<1x8x128xf32>
    %59 = vector.shape_cast %58 : vector<1x8x128xf32> to vector<8x128xf32>
    %60 = vector.shape_cast %56 : vector<8x128xf32> to vector<1x8x128xf32>
    tpu.vector_store %arg4[%57, %c0_16, %c0_17], %60 {strides = array<i32>} : memref<4x8x128xf32, #tpu.memory_space<vmem>>, vector<1x8x128xf32>,
    %c4_i32_18 = arith.constant 4 : i32
    return
  }
  func.func @transform_0(%arg0: i32, %arg1: i32, %arg2: memref<4xi32, #tpu.memory_space<smem>>) -> (i32, i32) {
    %c0_i32 = arith.constant 0 : i32
    %c0_i32_0 = arith.constant 0 : i32
    return %arg0, %c0_i32 : i32, i32
  }
  func.func @transform_1(%arg0: i32, %arg1: i32, %arg2: memref<4xi32, #tpu.memory_space<smem>>) -> (i32, i32, i32) {
    %c0_i32 = arith.constant 0 : i32
    %c0_i32_0 = arith.constant 0 : i32
    return %arg1, %arg0, %c0_i32 : i32, i32, i32
  }
}

</mosaic_0001>

<llo_original>
// kernel: tpu_custom_call.1
$region0: #{tpu_custom_call.1}
  #allocation0 [shape = 'u32[]', space=smem, size = 0x4, offset = 0x4, fixed_abs, tag = 'smem constant byte address 0x4 - core index']
  #allocation1 [shape = 'u32[144,128]{1,0:T(1,128)}', space=vmem, size = 0x12000, scoped, tag = 'internal scratch']
  #allocation2 [shape = 's32[1]{0}', space=sflag, size = 0x4, scoped, tag = 'scoped memory for tpu_custom_call.1']
  #allocation3 [shape = 'u8[512]{0}', space=smem, size = 0x200, scoped, tag = 'prefetched SMEM operand 0']
  %s0 = inlined_call_operand.hbm [shape: s32[4], index: 0, kind: input, shape index: {}]
  %s1 = inlined_call_operand.hbm [shape: f32[8,128], index: 1, kind: input, shape index: {}]
  %s2 = inlined_call_operand.hbm [shape: f32[4,8,128], index: 2, kind: output, shape index: {}]
  %s3 = sld [smem:[#allocation0]]
  $region18: #{tpu_custom_call.1} parent=0
    _
  %s5 = ssub.s32 1, %s3
  %s6 = scalar_select 0, %s5, %s3
  %8 = dma.hbm_to_smem %s0, 16, [#allocation3], [#allocation2]
  %9 = dma.done [#allocation2], 16
  %10 = sfence
  $region1: #{tpu_custom_call.1} parent=0
    #allocation4 [shape = 'u8[4096]{0}', space=vmem, size = 0x1000, scoped, tag = 'input window, operand 1, single buffered']
    #allocation5 [shape = 's32[1]{0}', space=sflag, size = 0x4, scoped, tag = 'scoped memory for tpu_custom_call.1']
    #allocation6 [shape = 's32[1]{0}', space=sflag, size = 0x4, scoped, tag = 'scoped memory for tpu_custom_call.1']
    #allocation7 [shape = 'u8[16384]{0}', space=vmem, size = 0x4000, scoped, tag = 'output window, operand 0, single buffered']
    %11 = vsyncpa [#allocation5], 0
    %12 = vsyncpa [#allocation6], 0
    // Predicated region
    $region2: #{tpu_custom_call.1} parent=1 // pred_check
      _
    $region3: #{tpu_custom_call.1} parent=1 // pred_check_branch
      %14 = sbr.rel (0) target = $region5
    $region4: #{tpu_custom_call.1} parent=1 // pred_region
      %s16 = ssub.s32 128, 128
      %17 = vsyncadd [#allocation5], %s16
      %s19 = sshll.u32 [#allocation4], 4
      %s20 = int_to_ptr.vmem [resolvable:$true] %s19
      %22 = dma.hbm_to_vmem [thread:$0]  %s1, 128, %s20, [#allocation5]
    $region5: #{tpu_custom_call.1} parent=1 // pred_fallthru
      _
    // Predicated region
    $region6: #{tpu_custom_call.1} parent=1 // pred_check
      _
    $region7: #{tpu_custom_call.1} parent=1 // pred_check_branch
      %24 = sbr.rel (0) target = $region9
    $region8: #{tpu_custom_call.1} parent=1 // pred_region
      %25 = dma.done [#allocation5], 128
    $region9: #{tpu_custom_call.1} parent=1 // pred_fallthru
      _
    %s26 = smul.u32 0, 1024
    %v27 = vlaneseq
    %v28 = vshrl.u32 %v27, 7
    %v29 = vmul.u32 %v28, 128
    %v30 = vstv %s26
    %v31 = vadd.s32 %v30, %v29
    %v32 = vlaneseq
    %v33 = vand.u32 %v32, 127
    %v34 = vadd.s32 %v31, %v33
    %v35 = vld [vmem:[#allocation4] sm:$0xff]
    %s36 = smul.u32 0, 4
    %s37 = sld [smem:[#allocation3 + %s36]]
    %s38 = smul.u32 %s37, 32
    %v39 = vstv %s38
    %vm40 = vcmp.lt.s32.totalorder %v34, %v39
    %v41 = vsel %vm40, %v35, 0.0
    %42 = vst [vmem:[#allocation7] sm:$0xff] %v41
    %s43 = sadd.s32 %s36, 1
    %s44 = sld [smem:[#allocation3 + %s43]]
    %s45 = smul.u32 %s44, 32
    %v46 = vstv %s45
    %vm47 = vcmp.lt.s32.totalorder %v34, %v46
    %v48 = vsel %vm47, %v35, 0.0
    %s49 = scalar_lea.vmem [#allocation7], 8
    %50 = vst [vmem:[%s49] sm:$0xff] %v48
    %s51 = sadd.s32 %s36, 2
    %s52 = sld [smem:[#allocation3 + %s51]]
    %s53 = smul.u32 %s52, 32
    %v54 = vstv %s53
    %vm55 = vcmp.lt.s32.totalorder %v34, %v54
    %v56 = vsel %vm55, %v35, 0.0
    %s57 = scalar_lea.vmem [#allocation7], 16
    %58 = vst [vmem:[%s57] sm:$0xff] %v56
    %s59 = sadd.s32 %s36, 3
    %s60 = sld [smem:[#allocation3 + %s59]]
    %s61 = smul.u32 %s60, 32
    %v62 = vstv %s61
    %vm63 = vcmp.lt.s32.totalorder %v34, %v62
    %v64 = vsel %vm63, %v35, 0.0
    %s65 = scalar_lea.vmem [#allocation7], 24
    %66 = vst [vmem:[%s65] sm:$0xff] %v64
    // Predicated region
    $region10: #{tpu_custom_call.1} parent=1 // pred_check
      _
    $region11: #{tpu_custom_call.1} parent=1 // pred_check_branch
      %68 = sbr.rel (0) target = $region13
    $region12: #{tpu_custom_call.1} parent=1 // pred_region
      %s70 = ssub.s32 512, 512
      %71 = vsyncadd [#allocation6], %s70
      %s72 = sshll.u32 [#allocation7], 4
      %s73 = int_to_ptr.vmem [resolvable:$true] %s72
      %78 = dma.vmem_to_hbm [thread:$0]  %s73, 512, %s2, [#allocation6], 128, 128, 8
    $region13: #{tpu_custom_call.1} parent=1 // pred_fallthru
      _
    // Predicated region
    $region14: #{tpu_custom_call.1} parent=1 // pred_check
      _
    $region15: #{tpu_custom_call.1} parent=1 // pred_check_branch
      %80 = sbr.rel (0) target = $region17
    $region16: #{tpu_custom_call.1} parent=1 // pred_region
      %81 = dma.done [#allocation6], 512
    $region17: #{tpu_custom_call.1} parent=1 // pred_fallthru
      _
    %82 = vsyncpa [#allocation5], 1
    %83 = vsyncpa [#allocation6], 1

</llo_original>
